<compile_context>
chip_gen: v7x
topology: tpu7x:2x2x1
jax: 0.10.0
libtpu: 0.0.40
codegen_flags: <defaults>
</compile_context>

<pallas_src>
import functools

import jax
import jax.numpy as jnp
from jax.experimental import pallas as pl
from jax.experimental.pallas import tpu as pltpu

_LANES = 128
_SUBLANES = 8
# 4096 rows x 128 lanes x 4 B = 2 MiB (f32) per input block.
_DEFAULT_TILE_ROWS = 4096


def _cdiv(a, b):
    return -(-a // b)


def _round_up(x, m):
    return _cdiv(x, m) * m


def _charbonnier_partial_kernel(pred_ref, tgt_ref, out_ref, acc_ref, *, eps):
    # Grid = (split, step): 'split' is parallel (megacore on v7x), 'step' is
    # the reduction axis over row-blocks of this split.
    step = pl.program_id(1)

    @pl.when(step == 0)
    def _():
        acc_ref[...] = jnp.zeros_like(acc_ref)

    d = pred_ref[...].astype(jnp.float32) - tgt_ref[...].astype(jnp.float32)
    val = jnp.sqrt(d * d + jnp.float32(eps))

    # Vreg-shaped accumulation: fold the tile's rows onto an (8, 128) f32
    # accumulator with plain VPU adds (no per-step cross-lane reduce, no
    # serialized scalar read-modify-write).
    tr = val.shape[0]
    acc_ref[...] += val.reshape(tr // _SUBLANES, _SUBLANES, _LANES).sum(axis=0)

    @pl.when(step == pl.num_programs(1) - 1)
    def _():
        out_ref[0] = acc_ref[...]


def _charbonnier_elementwise_kernel(pred_ref, tgt_ref, out_ref, *, eps):
    d = pred_ref[...].astype(jnp.float32) - tgt_ref[...].astype(jnp.float32)
    out_ref[...] = jnp.sqrt(d * d + jnp.float32(eps)).astype(out_ref.dtype)


def _as_lane_slab(x, padded_rows, n_pad):
    """Flatten to a (padded_rows, 128) slab; pad only when actually needed."""
    flat = x.reshape(-1)
    if n_pad:
        flat = jnp.pad(flat, (0, n_pad))
    return flat.reshape(padded_rows, _LANES)


def charbonnier_loss_pallas(pred, target, loss_weight=1.0, reduction="mean",
                            eps=1e-12, weight=None,
                            tile_rows=_DEFAULT_TILE_ROWS, num_splits=2):
    """Charbonnier loss ('none' | 'mean' | 'sum') via Pallas TPU kernels.

    pred, target: arrays of identical shape (e.g. (N, C, H, W)).
    """
    if reduction not in ("none", "mean", "sum"):
        raise ValueError(f"Unsupported reduction mode: {reduction}")
    if weight is not None:
        # TODO(synk): optional element-wise `weight` is not implemented (the
        # original helper's signature does not consume it either).
        raise NotImplementedError("element-wise `weight` is not supported")
    assert pred.shape == target.shape

    total = pred.size
    rows = _cdiv(total, _LANES)
    # Clamp the tile for small inputs (keep it a multiple of 8 sublanes) so a
    # tiny tensor is not padded out to a full 4096-row block.
    tile = _round_up(min(tile_rows, _round_up(rows, _SUBLANES)), _SUBLANES)
    steps_total = _cdiv(rows, tile)

    if reduction == "none":
        padded_rows = steps_total * tile
        n_pad = padded_rows * _LANES - total
        pred2d = _as_lane_slab(pred, padded_rows, n_pad)
        tgt2d = _as_lane_slab(target, padded_rows, n_pad)
        out2d = pl.pallas_call(
            functools.partial(_charbonnier_elementwise_kernel, eps=eps),
            out_shape=jax.ShapeDtypeStruct((padded_rows, _LANES), pred.dtype),
            grid_spec=pltpu.PrefetchScalarGridSpec(
                num_scalar_prefetch=0,
                grid=(steps_total,),
                in_specs=[
                    pl.BlockSpec((tile, _LANES), lambda i: (i, 0)),
                    pl.BlockSpec((tile, _LANES), lambda i: (i, 0)),
                ],
                out_specs=pl.BlockSpec((tile, _LANES), lambda i: (i, 0)),
            ),
            compiler_params=pltpu.CompilerParams(
                dimension_semantics=("parallel",),
            ),
        )(pred2d, tgt2d)
        out = out2d.reshape(-1)
        if n_pad:
            out = out[:total]
        out = out * jnp.asarray(loss_weight, out.dtype)
        return out.reshape(pred.shape)

    # --- 'mean' / 'sum': on-chip partial reduction ---
    splits = num_splits if (num_splits > 1 and steps_total >= num_splits) else 1
    steps = _cdiv(steps_total, splits)
    padded_rows = splits * steps * tile
    n_pad = padded_rows * _LANES - total
    if splits > 1 and n_pad > 0 and steps_total * tile * _LANES == total:
        # Splitting across cores would force a full-tensor pad copy that a
        # single split does not need; the extra HBM read+write pass costs more
        # than megacore parallelism gains on a bandwidth-bound kernel.
        splits, steps = 1, steps_total
        padded_rows = steps_total * tile
        n_pad = 0

    # Keep the original dtype through the BlockSpec (bf16 inputs stream half
    # the HBM bytes); cast to f32 inside the kernel.
    pred2d = _as_lane_slab(pred, padded_rows, n_pad)
    tgt2d = _as_lane_slab(target, padded_rows, n_pad)

    kernel = functools.partial(_charbonnier_partial_kernel, eps=eps)

    partials = pl.pallas_call(
        kernel,
        out_shape=jax.ShapeDtypeStruct((splits, _SUBLANES, _LANES),
                                       jnp.float32),
        grid_spec=pltpu.PrefetchScalarGridSpec(
            num_scalar_prefetch=0,
            grid=(splits, steps),
            in_specs=[
                pl.BlockSpec((tile, _LANES),
                             lambda s, i: (s * steps + i, 0)),
                pl.BlockSpec((tile, _LANES),
                             lambda s, i: (s * steps + i, 0)),
            ],
            out_specs=pl.BlockSpec((1, _SUBLANES, _LANES),
                                   lambda s, i: (s, 0, 0)),
            scratch_shapes=[pltpu.VMEM((_SUBLANES, _LANES), jnp.float32)],
        ),
        compiler_params=pltpu.CompilerParams(
            dimension_semantics=("parallel", "arbitrary"),
        ),
    )(pred2d, tgt2d)

    s = jnp.sum(partials, dtype=jnp.float32)
    # Each zero-padded element contributed sqrt(0 + eps); remove it exactly.
    if n_pad:
        s = s - jnp.float32(n_pad) * jnp.sqrt(jnp.float32(eps))
    if reduction == "mean":
        s = s / jnp.float32(total)
    return jnp.float32(loss_weight) * s


def _ref_loss(pred, target, loss_weight, reduction, eps):
    val = jnp.sqrt((pred.astype(jnp.float32)
                    - target.astype(jnp.float32)) ** 2 + jnp.float32(eps))
    if reduction == "mean":
        val = jnp.mean(val)
    elif reduction == "sum":
        val = jnp.sum(val)
    return jnp.float32(loss_weight) * val


if __name__ == "__main__":
    key = jax.random.PRNGKey(0)

    # 1) Module-typical small shape, mean reduction (default path, no pad).
    k1, k2 = jax.random.split(key)
    N, C, H, W = 2, 4, 16, 16
    pred = jax.random.normal(k1, (N, C, H, W), dtype=jnp.float32)
    target = jax.random.normal(k2, (N, C, H, W), dtype=jnp.float32)
    loss = jax.block_until_ready(
        charbonnier_loss_pallas(pred, target, loss_weight=1.0,
                                reduction="mean", eps=1e-12))
    ref = _ref_loss(pred, target, 1.0, "mean", 1e-12)
    assert jnp.allclose(loss, ref, rtol=2e-5, atol=1e-6), (loss, ref)

    # 2) Non-128-divisible shape, sum reduction -> exercises the padding path.
    k3, k4 = jax.random.split(k1)
    pred2 = jax.random.normal(k3, (2, 3, 17, 19), dtype=jnp.float32)
    target2 = jax.random.normal(k4, (2, 3, 17, 19), dtype=jnp.float32)
    loss2 = jax.block_until_ready(
        charbonnier_loss_pallas(pred2, target2, loss_weight=0.5,
                                reduction="sum", eps=1e-12))
    ref2 = _ref_loss(pred2, target2, 0.5, "sum", 1e-12)
    assert jnp.allclose(loss2, ref2, rtol=2e-5, atol=1e-5), (loss2, ref2)

    # 3) Force a small tile so the (parallel split x multi-step reduction)
    #    grid path is exercised even at small size: grid = (2, 2), no pad.
    k5, k6 = jax.random.split(k3)
    pred3 = jax.random.normal(k5, (2, 4, 16, 32), dtype=jnp.float32)
    target3 = jax.random.normal(k6, (2, 4, 16, 32), dtype=jnp.float32)
    loss3 = jax.block_until_ready(
        charbonnier_loss_pallas(pred3, target3, loss_weight=1.0,
                                reduction="mean", eps=1e-12, tile_rows=8))
    ref3 = _ref_loss(pred3, target3, 1.0, "mean", 1e-12)
    assert jnp.allclose(loss3, ref3, rtol=2e-5, atol=1e-6), (loss3, ref3)

    # 4) 'none' reduction on an unaligned shape -> elementwise kernel + slice.
    loss4 = jax.block_until_ready(
        charbonnier_loss_pallas(pred2, target2, loss_weight=1.0,
                                reduction="none", eps=1e-12))
    ref4 = jnp.sqrt((pred2 - target2) ** 2 + jnp.float32(1e-12))
    assert loss4.shape == pred2.shape
    assert jnp.allclose(loss4, ref4, rtol=2e-5, atol=1e-6)

    print("KERNEL_OK")
</pallas_src>

<mosaic_0001>
module attributes {stable_mosaic.version = 11 : i64} {
  func.func @_charbonnier_partial_kernel(%arg0: i32, %arg1: i32, %arg2: memref<16x128xf32, #tpu.memory_space<vmem>>, %arg3: memref<16x128xf32, #tpu.memory_space<vmem>>, %arg4: memref<1x8x128xf32, #tpu.memory_space<vmem>>, %arg5: memref<8x128xf32, #tpu.memory_space<vmem>>) attributes {dimension_semantics = [#tpu.dimension_semantics<parallel>, #tpu.dimension_semantics<arbitrary>], iteration_bounds = array<i64: 1, 1>, scalar_prefetch = 0 : i64, scratch_operands = 1 : i64, tpu.core_type = #tpu.core_type<tc>, window_params = [{transform_indices = @transform_0, window_bounds = array<i64: 16, 128>}, {transform_indices = @transform_1, window_bounds = array<i64: 16, 128>}, {transform_indices = @transform_2, window_bounds = array<i64: 1, 8, 128>}]} {
    %c0_i32 = arith.constant 0 : i32
    %0 = arith.cmpi eq, %arg1, %c0_i32 : i32
    %1 = arith.extui %0 : i1 to i32
    %c0_i32_0 = arith.constant 0 : i32
    %2 = arith.cmpi ne, %1, %c0_i32_0 : i32
    scf.if %2 {
      %cst_11 = arith.constant 0.000000e+00 : f32
      %18 = vector.broadcast %cst_11 : f32 to vector<8x128xf32>
      %c0_12 = arith.constant 0 : index
      %c0_13 = arith.constant 0 : index
      %19 = vector.load %arg5[%c0_12, %c0_13] : memref<8x128xf32, #tpu.memory_space<vmem>>, vector<8x128xf32>
      tpu.vector_store %arg5[%c0_12, %c0_13], %18 {strides = array<i32>} : memref<8x128xf32, #tpu.memory_space<vmem>>, vector<8x128xf32>,
    } else {
    }
    %c0 = arith.constant 0 : index
    %c0_1 = arith.constant 0 : index
    %3 = vector.load %arg2[%c0, %c0_1] : memref<16x128xf32, #tpu.memory_space<vmem>>, vector<16x128xf32>
    %c0_2 = arith.constant 0 : index
    %c0_3 = arith.constant 0 : index
    %4 = vector.load %arg3[%c0_2, %c0_3] : memref<16x128xf32, #tpu.memory_space<vmem>>, vector<16x128xf32>
    %5 = arith.subf %3, %4 : vector<16x128xf32>
    %6 = arith.mulf %5, %5 : vector<16x128xf32>
    %cst = arith.constant 9.99999996E-13 : f32
    %7 = vector.broadcast %cst : f32 to vector<16x128xf32>
    %8 = arith.addf %6, %7 : vector<16x128xf32>
    %9 = math.sqrt %8 : vector<16x128xf32>
    %c0_4 = arith.constant 0 : index
    %c0_5 = arith.constant 0 : index
    %10 = vector.load %arg5[%c0_4, %c0_5] : memref<8x128xf32, #tpu.memory_space<vmem>>, vector<8x128xf32>
    %11 = vector.shape_cast %9 : vector<16x128xf32> to vector<2x8x128xf32>
    %cst_6 = arith.constant dense<0.000000e+00> : vector<8x128xf32>
    %12 = vector.multi_reduction <add>, %11, %cst_6 [0] : vector<2x8x128xf32> to vector<8x128xf32>
    %13 = arith.addf %10, %12 : vector<8x128xf32>
    %c0_7 = arith.constant 0 : index
    %c0_8 = arith.constant 0 : index
    %14 = vector.load %arg5[%c0_7, %c0_8] : memref<8x128xf32, #tpu.memory_space<vmem>>, vector<8x128xf32>
    tpu.vector_store %arg5[%c0_7, %c0_8], %13 {strides = array<i32>} : memref<8x128xf32, #tpu.memory_space<vmem>>, vector<8x128xf32>,
    %c0_i32_9 = arith.constant 0 : i32
    %15 = arith.cmpi eq, %arg1, %c0_i32_9 : i32
    %16 = arith.extui %15 : i1 to i32
    %c0_i32_10 = arith.constant 0 : i32
    %17 = arith.cmpi ne, %16, %c0_i32_10 : i32
    scf.if %17 {
      %c0_11 = arith.constant 0 : index
      %c0_12 = arith.constant 0 : index
      %18 = vector.load %arg5[%c0_11, %c0_12] : memref<8x128xf32, #tpu.memory_space<vmem>>, vector<8x128xf32>
      %c0_13 = arith.constant 0 : index
      %c0_14 = arith.constant 0 : index
      %c0_15 = arith.constant 0 : index
      %19 = vector.load %arg4[%c0_13, %c0_14, %c0_15] : memref<1x8x128xf32, #tpu.memory_space<vmem>>, vector<1x8x128xf32>
      %20 = vector.shape_cast %19 : vector<1x8x128xf32> to vector<8x128xf32>
      %21 = vector.shape_cast %18 : vector<8x128xf32> to vector<1x8x128xf32>
      tpu.vector_store %arg4[%c0_13, %c0_14, %c0_15], %21 {strides = array<i32>} : memref<1x8x128xf32, #tpu.memory_space<vmem>>, vector<1x8x128xf32>,
    } else {
    }
    return
  }
  func.func @transform_0(%arg0: i32, %arg1: i32) -> (i32, i32) {
    %c1_i32 = arith.constant 1 : i32
    %0 = arith.muli %arg0, %c1_i32 : i32
    %1 = arith.addi %0, %arg1 : i32
    %c0_i32 = arith.constant 0 : i32
    %c0_i32_0 = arith.constant 0 : i32
    return %1, %c0_i32 : i32, i32
  }
  func.func @transform_1(%arg0: i32, %arg1: i32) -> (i32, i32) {
    %c1_i32 = arith.constant 1 : i32
    %0 = arith.muli %arg0, %c1_i32 : i32
    %1 = arith.addi %0, %arg1 : i32
    %c0_i32 = arith.constant 0 : i32
    %c0_i32_0 = arith.constant 0 : i32
    return %1, %c0_i32 : i32, i32
  }
  func.func @transform_2(%arg0: i32, %arg1: i32) -> (i32, i32, i32) {
    %c0_i32 = arith.constant 0 : i32
    %c0_i32_0 = arith.constant 0 : i32
    %c0_i32_1 = arith.constant 0 : i32
    return %arg0, %c0_i32, %c0_i32_0 : i32, i32, i32
  }
}

</mosaic_0001>

<llo_original>
// kernel: tpu_custom_call.1
$region0: #{tpu_custom_call.1}
  #allocation0 [shape = 'u32[]', space=smem, size = 0x4, offset = 0x4, fixed_abs, tag = 'smem constant byte address 0x4 - core index']
  #allocation1 [shape = 'u32[144,128]{1,0:T(1,128)}', space=vmem, size = 0x12000, scoped, tag = 'internal scratch']
  #allocation2 [shape = 'f32[8,128]{1,0:T(8,128)}', space=vmem, size = 0x1000, scoped, tag = 'scratch operand']
  %s0 = inlined_call_operand.hbm [shape: f32[16,128], index: 0, kind: input, shape index: {}]
  %s1 = inlined_call_operand.hbm [shape: f32[16,128], index: 1, kind: input, shape index: {}]
  %s2 = inlined_call_operand.hbm [shape: f32[1,8,128], index: 2, kind: output, shape index: {}]
  %s3 = sld [smem:[#allocation0]]
  $region34: #{tpu_custom_call.1} parent=0
    _
  %s5 = ssub.s32 1, %s3
  %s6 = scalar_select 0, %s5, %s3
  $region1: #{tpu_custom_call.1} parent=0
    #allocation3 [shape = 'u8[8192]{0}', space=vmem, size = 0x2000, scoped, tag = 'input window, operand 0, single buffered']
    #allocation4 [shape = 's32[1]{0}', space=sflag, size = 0x4, scoped, tag = 'scoped memory for tpu_custom_call.1']
    #allocation5 [shape = 's32[1]{0}', space=sflag, size = 0x4, scoped, tag = 'scoped memory for tpu_custom_call.1']
    #allocation6 [shape = 'u8[8192]{0}', space=vmem, size = 0x2000, scoped, tag = 'input window, operand 1, single buffered']
    #allocation7 [shape = 's32[1]{0}', space=sflag, size = 0x4, scoped, tag = 'scoped memory for tpu_custom_call.1']
    #allocation8 [shape = 'u8[4096]{0}', space=vmem, size = 0x1000, scoped, tag = 'output window, operand 0, single buffered']
    %7 = vsyncpa [#allocation4], 0
    %8 = vsyncpa [#allocation7], 0
    %9 = vsyncpa [#allocation5], 0
    // Predicated region
    $region2: #{tpu_custom_call.1} parent=1 // pred_check
      _
    $region3: #{tpu_custom_call.1} parent=1 // pred_check_branch
      %11 = sbr.rel (0) target = $region5
    $region4: #{tpu_custom_call.1} parent=1 // pred_region
      %s12 = sadd.s32 0, 0
      %s13 = smul.u32 2, %s12
      %s15 = ssub.s32 256, 256
      %16 = vsyncadd [#allocation4], %s15
      %s17 = smul.addr %s13, 128
      %s18 = scalar_lea.hbm %s0, %s17
      %s19 = sshll.u32 [#allocation3], 4
      %s20 = int_to_ptr.vmem [resolvable:$true] %s19
      %25 = dma.hbm_to_vmem [thread:$0]  %s18, 256, %s20, [#allocation4], 128, 128, 8
    $region5: #{tpu_custom_call.1} parent=1 // pred_fallthru
      _
    // Predicated region
    $region6: #{tpu_custom_call.1} parent=1 // pred_check
      _
    $region7: #{tpu_custom_call.1} parent=1 // pred_check_branch
      %27 = sbr.rel (0) target = $region9
    $region8: #{tpu_custom_call.1} parent=1 // pred_region
      %s28 = sadd.s32 0, 0
      %s29 = smul.u32 2, %s28
      %s31 = ssub.s32 256, 256
      %32 = vsyncadd [#allocation7], %s31
      %s33 = smul.addr %s29, 128
      %s34 = scalar_lea.hbm %s1, %s33
      %s35 = sshll.u32 [#allocation6], 4
      %s36 = int_to_ptr.vmem [resolvable:$true] %s35
      %41 = dma.hbm_to_vmem [thread:$0]  %s34, 256, %s36, [#allocation7], 128, 128, 8
    $region9: #{tpu_custom_call.1} parent=1 // pred_fallthru
      _
    // Predicated region
    $region10: #{tpu_custom_call.1} parent=1 // pred_check
      _
    $region11: #{tpu_custom_call.1} parent=1 // pred_check_branch
      %43 = sbr.rel (0) target = $region13
    $region12: #{tpu_custom_call.1} parent=1 // pred_region
      %44 = dma.done [#allocation4], 256
    $region13: #{tpu_custom_call.1} parent=1 // pred_fallthru
      _
    // Predicated region
    $region14: #{tpu_custom_call.1} parent=1 // pred_check
      _
    $region15: #{tpu_custom_call.1} parent=1 // pred_check_branch
      %46 = sbr.rel (0) target = $region17
    $region16: #{tpu_custom_call.1} parent=1 // pred_region
      %47 = dma.done [#allocation7], 256
    $region17: #{tpu_custom_call.1} parent=1 // pred_fallthru
      _
    %s48 = sadd.s32 0, 0
    %s49 = smul.u32 2, %s48
    %s50 = sadd.s32 0, 0
    %s51 = smul.u32 2, %s50
    %p52 = scmp.eq.s32.totalorder 0, 0
    // Predicated region
    $region18: #{tpu_custom_call.1} parent=1 // pred_check
      %p53 = pneg %p52
    $region19: #{tpu_custom_call.1} parent=1 // pred_check_branch
      %55 = sbr.rel (%p53) target = $region21
    $region20: #{tpu_custom_call.1} parent=1 // pred_region
      %56 = vst [vmem:[#allocation2] sm:$0xff] 0.0
    $region21: #{tpu_custom_call.1} parent=1 // pred_fallthru
      _
    %v57 = vld [vmem:[#allocation3] sm:$0xff]
    %v58 = vld [vmem:[#allocation3 + $0x8] sm:$0xff]
    %v59 = vld [vmem:[#allocation6] sm:$0xff]
    %v60 = vld [vmem:[#allocation6 + $0x8] sm:$0xff]
    %v61 = vsub.f32 %v57, %v59
    %v62 = vsub.f32 %v58, %v60
    %v63 = vmul.f32 %v61, %v61
    %v64 = vmul.f32 %v62, %v62
    %v65 = vadd.f32 %v63, 1e-12
    %v66 = vadd.f32 %v64, 1e-12
    %v67 = vrsqrt.pop %v65
    %v68 = vmul.f32 %v65, %v67
    %vm69 = vcmp.eq.f32.partialorder %v65, inf
    %v70 = vsel %vm69, %v65, %v68
    %vm71 = vcmp.eq.f32.partialorder %v65, 0.0
    %v72 = vand.u32 %v65, 2147483648
    %v73 = vsel %vm71, %v72, %v70
    %v74 = vrsqrt.pop %v66
    %v75 = vmul.f32 %v66, %v74
    %vm76 = vcmp.eq.f32.partialorder %v66, inf
    %v77 = vsel %vm76, %v66, %v75
    %vm78 = vcmp.eq.f32.partialorder %v66, 0.0
    %v79 = vand.u32 %v66, 2147483648
    %v80 = vsel %vm78, %v79, %v77
    %v81 = vld [vmem:[#allocation2] sm:$0xff]
    %v82 = vadd.f32 %v73, %v80
    %v83 = vadd.f32 %v81, %v82
    %84 = vst [vmem:[#allocation2] sm:$0xff] %v83
    // Predicated region
    $region22: #{tpu_custom_call.1} parent=1 // pred_check
      %p85 = pneg %p52
    $region23: #{tpu_custom_call.1} parent=1 // pred_check_branch
      %87 = sbr.rel (%p85) target = $region25
    $region24: #{tpu_custom_call.1} parent=1 // pred_region
      %v88 = vld [vmem:[#allocation2] sm:$0xff]
      %89 = vst [vmem:[#allocation8] sm:$0xff] %v88
    $region25: #{tpu_custom_call.1} parent=1 // pred_fallthru
      _
    // Predicated region
    $region26: #{tpu_custom_call.1} parent=1 // pred_check
      _
    $region27: #{tpu_custom_call.1} parent=1 // pred_check_branch
      %91 = sbr.rel (0) target = $region29
    $region28: #{tpu_custom_call.1} parent=1 // pred_region
      %s93 = ssub.s32 128, 128
      %94 = vsyncadd [#allocation5], %s93
      %s96 = sshll.u32 [#allocation8], 4
      %s97 = int_to_ptr.vmem [resolvable:$true] %s96
      %99 = dma.vmem_to_hbm [thread:$0]  %s97, 128, %s2, [#allocation5]
    $region29: #{tpu_custom_call.1} parent=1 // pred_fallthru
      _
    // Predicated region
    $region30: #{tpu_custom_call.1} parent=1 // pred_check
      _
    $region31: #{tpu_custom_call.1} parent=1 // pred_check_branch
      %101 = sbr.rel (0) target = $region33
    $region32: #{tpu_custom_call.1} parent=1 // pred_region
      %102 = dma.done [#allocation5], 128
    $region33: #{tpu_custom_call.1} parent=1 // pred_fallthru
      _
    %103 = vsyncpa [#allocation4], 1
    %104 = vsyncpa [#allocation7], 1
    %105 = vsyncpa [#allocation5], 1

</llo_original>
